<compile_context>
chip_gen: v6e
topology: v6e:2x2x1
jax: 0.10.0
libtpu: 0.0.40
codegen_flags: <defaults>
</compile_context>

<pallas_src>
import numpy as np
import jax
import jax.numpy as jnp
from jax.experimental import pallas as pl
from jax.experimental.pallas import tpu as pltpu


ROWS_PER_STEP = 8              # full sublane occupancy for 32-bit dtypes
MAX_LANE_TILE = 8192           # max lanes per D tile (multiple of 128)
SMALL_BYTES = 2 * 1024 * 1024  # single-step in-VMEM path below this (padded)


def _round_up(x, m):
    return (x + m - 1) // m * m


# ---------------------------------------------------------------------------
# Parameter ("permutation") construction — mirrors PermutationLayer.__init__
# deterministically (same semantics: only key==True positions are permuted).
# ---------------------------------------------------------------------------
def build_permutation(key_bits: np.ndarray) -> np.ndarray:
    key_bits = np.asarray(key_bits).astype(bool)
    n_total = key_bits.shape[0]
    asint = int("".join(str(int(b)) for b in key_bits), 2)
    # TODO(synk): torch.Generator/torch.randperm's RNG bit-stream is not
    # reproducible in JAX; we keep the same semantics (deterministic perm of
    # the selected indices, seeded by the key bits) via jax.random instead.
    seed = asint & 0x7FFFFFFFFFFFFFFF  # keep seed in PRNGKey's accepted range
    n_sel = int(key_bits.sum())
    perm = np.asarray(jax.random.permutation(jax.random.PRNGKey(seed), n_sel))
    permutations = np.arange(n_total)
    selected = permutations[key_bits]
    permutations[key_bits] = selected[perm]
    return permutations.astype(np.int32)


# ---------------------------------------------------------------------------
# Small-tensor path: whole array in VMEM, single grid step, in-kernel gather.
# ---------------------------------------------------------------------------
def _gather_small_kernel(perm_ref, x_ref, o_ref):
    n_rows = o_ref.shape[0]

    def body(i, carry):
        src = perm_ref[i]
        o_ref[pl.ds(i, 1), :] = x_ref[pl.ds(src, 1), :]
        return carry

    jax.lax.fori_loop(0, n_rows, body, 0)


# ---------------------------------------------------------------------------
# General path: manual-DMA gather of lane/sublane-dense (R, TD) slabs.
# ---------------------------------------------------------------------------
def _make_gather_dma_kernel(rows_per_step, lane_tile):
    R, TD = rows_per_step, lane_tile

    def kernel(perm_ref, x_hbm, o_ref, buf, sems):
        i = pl.program_id(0)      # row-block index (parallel axis)
        j = pl.program_id(1)      # D-tile index (arbitrary axis)
        nj = pl.num_programs(1)
        row_base = i * R
        slot = j % 2

        def make_copies(col_blk, s):
            col = pl.multiple_of(col_blk * TD, 128)
            copies = []
            for r in range(R):
                src = perm_ref[row_base + r]
                copies.append(
                    pltpu.make_async_copy(
                        x_hbm.at[pl.ds(src, 1), pl.ds(col, TD)],
                        buf.at[s, pl.ds(r, 1)],
                        sems.at[s, r],
                    )
                )
            return copies

        @pl.when(j == 0)
        def _():
            # First D tile of this row block: start its 8 row DMAs now.
            for cp in make_copies(j, slot):
                cp.start()

        @pl.when(j + 1 < nj)
        def _():
            # Prefetch the next D tile of the same row block (other slot).
            for cp in make_copies(j + 1, 1 - slot):
                cp.start()

        for cp in make_copies(j, slot):
            cp.wait()

        o_ref[...] = buf[slot]

    return kernel


def permutation_layer_forward(x: jax.Array, perm: jax.Array,
                              *, force_general: bool = False) -> jax.Array:
    """out[i] = x[perm[i]], permutation along axis 0 (PermutationLayer.forward)."""
    orig_shape = x.shape
    N = int(orig_shape[0])
    D = 1
    for d in orig_shape[1:]:
        D *= int(d)
    x2 = x.reshape(N, D)
    perm = jnp.asarray(perm, dtype=jnp.int32)
    itemsize = jnp.dtype(x.dtype).itemsize

    padded_bytes = _round_up(N, 8) * _round_up(D, 128) * itemsize
    if not force_general and padded_bytes <= SMALL_BYTES:
        out = pl.pallas_call(
            _gather_small_kernel,
            out_shape=jax.ShapeDtypeStruct((N, D), x.dtype),
            grid_spec=pltpu.PrefetchScalarGridSpec(
                num_scalar_prefetch=1,
                grid=(1,),
                in_specs=[pl.BlockSpec((N, D), lambda i, perm_ref: (0, 0))],
                out_specs=pl.BlockSpec((N, D), lambda i, perm_ref: (0, 0)),
            ),
            compiler_params=pltpu.CompilerParams(
                dimension_semantics=("arbitrary",),
                vmem_limit_bytes=int(min(64 * 1024 * 1024,
                                         max(4 * 1024 * 1024,
                                             5 * padded_bytes))),
            ),
        )(perm, x2)
        return out.reshape(orig_shape)

    # ---- general manual-DMA path ----
    R = ROWS_PER_STEP
    D_pad = _round_up(D, 128)
    num_d_tiles = pl.cdiv(D_pad, MAX_LANE_TILE)
    TD = _round_up(pl.cdiv(D_pad, num_d_tiles), 128)
    D_pad = TD * num_d_tiles
    N_pad = _round_up(N, R)

    if (N_pad, D_pad) != (N, D):
        x2 = jnp.pad(x2, ((0, N_pad - N), (0, D_pad - D)))
    if N_pad != N:
        # Padded rows map to themselves (in-bounds identity; sliced off later).
        perm = jnp.concatenate([perm, jnp.arange(N, N_pad, dtype=jnp.int32)])

    block_bytes = R * TD * itemsize
    vmem_limit = int(min(48 * 1024 * 1024,
                         max(4 * 1024 * 1024, 8 * block_bytes)))

    out = pl.pallas_call(
        _make_gather_dma_kernel(R, TD),
        out_shape=jax.ShapeDtypeStruct((N_pad, D_pad), x.dtype),
        grid_spec=pltpu.PrefetchScalarGridSpec(
            num_scalar_prefetch=1,
            grid=(N_pad // R, D_pad // TD),
            in_specs=[pl.BlockSpec(memory_space=pl.ANY)],   # raw HBM ref
            out_specs=pl.BlockSpec((R, TD), lambda i, j, perm_ref: (i, j)),
            scratch_shapes=[
                pltpu.VMEM((2, R, TD), x.dtype),        # double-buffered slab
                pltpu.SemaphoreType.DMA((2, R)),
            ],
        ),
        compiler_params=pltpu.CompilerParams(
            dimension_semantics=("parallel", "arbitrary"),
            vmem_limit_bytes=vmem_limit,
        ),
    )(perm, x2)

    out = out[:N, :D]
    return out.reshape(orig_shape)


if __name__ == "__main__":
    # key of length 8 -> permutation over the leading (batch) axis of size 8.
    key_bits = np.array([1, 0, 1, 1, 0, 1, 0, 1], dtype=bool)
    perm_np = build_permutation(key_bits)
    assert np.all(perm_np[~key_bits] == np.arange(8)[~key_bits])  # fixed points
    perm = jnp.asarray(perm_np, dtype=jnp.int32)

    rng = jax.random.PRNGKey(0)
    x = jax.random.normal(rng, (8, 4, 16, 16), dtype=jnp.float32)
    ref = np.asarray(x)[perm_np]

    # 1) small-tensor single-step path
    out_small = jax.block_until_ready(permutation_layer_forward(x, perm))
    np.testing.assert_allclose(np.asarray(out_small), ref, rtol=0, atol=0)

    # 2) general manual-DMA path on the same input
    out_gen = jax.block_until_ready(
        permutation_layer_forward(x, perm, force_general=True))
    np.testing.assert_allclose(np.asarray(out_gen), ref, rtol=0, atol=0)

    # 3) general path with ragged shapes (row + lane padding exercised)
    key_bits2 = np.array([1, 1, 0, 1, 0, 1, 1, 1, 0, 1], dtype=bool)
    perm2_np = build_permutation(key_bits2)
    perm2 = jnp.asarray(perm2_np, dtype=jnp.int32)
    x2 = jax.random.normal(jax.random.PRNGKey(1), (10, 3, 9, 9), jnp.float32)
    ref2 = np.asarray(x2)[perm2_np]
    out2 = jax.block_until_ready(
        permutation_layer_forward(x2, perm2, force_general=True))
    np.testing.assert_allclose(np.asarray(out2), ref2, rtol=0, atol=0)

    # 4) small path with ragged shapes
    out3 = jax.block_until_ready(permutation_layer_forward(x2, perm2))
    np.testing.assert_allclose(np.asarray(out3), ref2, rtol=0, atol=0)

    print("KERNEL_OK")
</pallas_src>

<mosaic_0001>
module attributes {stable_mosaic.version = 11 : i64} {
  func.func @_gather_small_kernel(%arg0: i32, %arg1: memref<8xi32, #tpu.memory_space<smem>>, %arg2: memref<8x1024xf32, #tpu.memory_space<vmem>>, %arg3: memref<8x1024xf32, #tpu.memory_space<vmem>>) attributes {dimension_semantics = [#tpu.dimension_semantics<arbitrary>], iteration_bounds = array<i64: 1>, scalar_prefetch = 1 : i64, scratch_operands = 0 : i64, tpu.core_type = #tpu.core_type<tc>, window_params = [{pipeline_mode = #tpu.pipeline_mode<synchronous>, transform_indices = @transform_0, window_bounds = array<i64: 8, 1024>}, {pipeline_mode = #tpu.pipeline_mode<synchronous>, transform_indices = @transform_1, window_bounds = array<i64: 8, 1024>}]} {
    %c0_i32 = arith.constant 0 : i32
    %c8_i32 = arith.constant 8 : i32
    %0 = arith.addi %c0_i32, %c8_i32 : i32
    %c1_i32 = arith.constant 1 : i32
    scf.for %arg4 = %c0_i32 to %0 step %c1_i32  : i32 {
      %1 = arith.index_cast %arg4 : i32 to index
      %2 = memref.load %arg1[%1] : memref<8xi32, #tpu.memory_space<smem>>
      %3 = arith.index_cast %2 : i32 to index
      %c0 = arith.constant 0 : index
      %4 = vector.load %arg2[%3, %c0] : memref<8x1024xf32, #tpu.memory_space<vmem>>, vector<1x1024xf32>
      %5 = arith.index_cast %arg4 : i32 to index
      %c0_1 = arith.constant 0 : index
      %6 = vector.load %arg3[%5, %c0_1] : memref<8x1024xf32, #tpu.memory_space<vmem>>, vector<1x1024xf32>
      tpu.vector_store %arg3[%5, %c0_1], %4 {strides = array<i32>} : memref<8x1024xf32, #tpu.memory_space<vmem>>, vector<1x1024xf32>,
    }
    %c8_i32_0 = arith.constant 8 : i32
    return
  }
  func.func @transform_0(%arg0: i32, %arg1: memref<8xi32, #tpu.memory_space<smem>>) -> (i32, i32) {
    %c0_i32 = arith.constant 0 : i32
    %c0_i32_0 = arith.constant 0 : i32
    %c0_i32_1 = arith.constant 0 : i32
    return %c0_i32, %c0_i32_0 : i32, i32
  }
  func.func @transform_1(%arg0: i32, %arg1: memref<8xi32, #tpu.memory_space<smem>>) -> (i32, i32) {
    %c0_i32 = arith.constant 0 : i32
    %c0_i32_0 = arith.constant 0 : i32
    %c0_i32_1 = arith.constant 0 : i32
    return %c0_i32, %c0_i32_0 : i32, i32
  }
}

</mosaic_0001>

<llo_original>
// kernel: tpu_custom_call.1
$region0: #{tpu_custom_call.1}
  #allocation0 [shape = 'u32[]', space=smem, size = 0x4, offset = 0x4, fixed_abs, tag = 'smem constant byte address 0x4 - core index']
  #allocation1 [shape = 'u32[144,128]{1,0:T(1,128)}', space=vmem, size = 0x12000, scoped, tag = 'internal scratch']
  #allocation2 [shape = 's32[1]{0}', space=sflag, size = 0x4, scoped, tag = 'scoped memory for tpu_custom_call.1']
  #allocation3 [shape = 'u8[512]{0}', space=smem, size = 0x200, scoped, tag = 'prefetched SMEM operand 0']
  %s0 = inlined_call_operand.hbm [shape: s32[8], index: 0, kind: input, shape index: {}]
  %s1 = inlined_call_operand.hbm [shape: f32[8,1024], index: 1, kind: input, shape index: {}]
  %s2 = inlined_call_operand.hbm [shape: f32[8,1024], index: 2, kind: output, shape index: {}]
  %s3 = sld [smem:[#allocation0]]
  $region25: #{tpu_custom_call.1} parent=0
    _
  %s5 = ssub.s32 1, %s3
  %s6 = scalar_select 0, %s5, %s3
  %8 = dma.hbm_to_smem %s0, 16, [#allocation3], [#allocation2]
  %9 = dma.done [#allocation2], 16
  %10 = sfence
  $region1: #{tpu_custom_call.1} parent=0
    #allocation4 [shape = 'u8[32768]{0}', space=vmem, size = 0x8000, scoped, tag = 'input window, operand 1, single buffered']
    #allocation5 [shape = 's32[1]{0}', space=sflag, size = 0x4, scoped, tag = 'scoped memory for tpu_custom_call.1']
    #allocation6 [shape = 's32[1]{0}', space=sflag, size = 0x4, scoped, tag = 'scoped memory for tpu_custom_call.1']
    #allocation7 [shape = 'u8[32768]{0}', space=vmem, size = 0x8000, scoped, tag = 'output window, operand 0, single buffered']
    %11 = vsyncpa [#allocation5], 0
    %12 = vsyncpa [#allocation6], 0
    // Predicated region
    $region2: #{tpu_custom_call.1} parent=1 // pred_check
      _
    $region3: #{tpu_custom_call.1} parent=1 // pred_check_branch
      %14 = sbr.rel (0) target = $region5
    $region4: #{tpu_custom_call.1} parent=1 // pred_region
      %s16 = ssub.s32 1024, 1024
      %17 = vsyncadd [#allocation5], %s16
      %s19 = sshll.u32 [#allocation4], 4
      %s20 = int_to_ptr.vmem [resolvable:$true] %s19
      %22 = dma.hbm_to_vmem [thread:$0]  %s1, 1024, %s20, [#allocation5]
    $region5: #{tpu_custom_call.1} parent=1 // pred_fallthru
      _
    // Predicated region
    $region6: #{tpu_custom_call.1} parent=1 // pred_check
      _
    $region7: #{tpu_custom_call.1} parent=1 // pred_check_branch
      %24 = sbr.rel (0) target = $region9
    $region8: #{tpu_custom_call.1} parent=1 // pred_region
      %25 = dma.done [#allocation5], 1024
    $region9: #{tpu_custom_call.1} parent=1 // pred_fallthru
      _
    loop: start=0, step=1, limit=8
    $region10: #{tpu_custom_call.1} parent=1 // loop_pre_header
      _
    $region11: #{tpu_custom_call.1} parent=1 // loop_header
      %s27 = sphi 0, %s31
      %p28 = scmp.ge.s32.totalorder %s27, 8
    $region12: #{tpu_custom_call.1} parent=1 // loop_header_branch
      %30 = sbr.rel (%p28) target = $region16
    $region13: #{tpu_custom_call.1} parent=1 // loop_body
      %s32 = sld [smem:[#allocation3 + %s27]]
      %s33 = sshra.s32 %s32, 3
      %s34 = sand.u32 %s32, 7
      %s35 = sshra.s32 %s32, 3
      %s36 = sand.u32 %s32, 7
      %s37 = smul.u32 %s33, 8
      %s38 = smul.u32 %s37, 8
      %s39 = sadd.s32 %s38, %s36
      %s40 = scalar_lea.vmem [#allocation4], %s39
      %v41 = vld [vmem:[%s40] ss:$8 sm:$0xf]
      %v42 = vld [vmem:[%s40] ss:$8 sm:$0xf0]
      %v43 = vor.u32 %v41, %v42
      %s44 = sshra.s32 %s27, 3
      %s45 = sand.u32 %s27, 7
      %s46 = sshra.s32 %s27, 3
      %s47 = sand.u32 %s27, 7
      %s48 = smul.u32 %s44, 8
      %s49 = smul.u32 %s48, 8
      %s50 = sadd.s32 %s49, %s47
      %s51 = scalar_lea.vmem [#allocation7], %s50
      %52 = vst [vmem:[%s51] ss:$8 sm:$0xf] %v43
      %53 = vst [vmem:[%s51] ss:$8 sm:$0xf0] %v43
    $region14: #{tpu_custom_call.1} parent=1 // loop_footer
      %s31 = sadd.s32 1, %s27
    $region15: #{tpu_custom_call.1} parent=1 // loop_footer_branch
      %26 = sbr.rel target = $region11
    $region16: #{tpu_custom_call.1} parent=1 // loop_exit
      _
    // Predicated region
    $region17: #{tpu_custom_call.1} parent=1 // pred_check
      _
    $region18: #{tpu_custom_call.1} parent=1 // pred_check_branch
      %55 = sbr.rel (0) target = $region20
    $region19: #{tpu_custom_call.1} parent=1 // pred_region
      %s57 = ssub.s32 1024, 1024
      %58 = vsyncadd [#allocation6], %s57
      %s60 = sshll.u32 [#allocation7], 4
      %s61 = int_to_ptr.vmem [resolvable:$true] %s60
      %63 = dma.vmem_to_hbm [thread:$0]  %s61, 1024, %s2, [#allocation6]
    $region20: #{tpu_custom_call.1} parent=1 // pred_fallthru
      _
    // Predicated region
    $region21: #{tpu_custom_call.1} parent=1 // pred_check
      _
    $region22: #{tpu_custom_call.1} parent=1 // pred_check_branch
      %65 = sbr.rel (0) target = $region24
    $region23: #{tpu_custom_call.1} parent=1 // pred_region
      %66 = dma.done [#allocation6], 1024
    $region24: #{tpu_custom_call.1} parent=1 // pred_fallthru
      _
    %67 = vsyncpa [#allocation5], 1
    %68 = vsyncpa [#allocation6], 1

</llo_original>
